<compile_context>
chip_gen: v6e
topology: v6e:2x2x1
jax: 0.10.0
libtpu: 0.0.40
codegen_flags: <defaults>
</compile_context>

<pallas_src>
import functools

import jax
import jax.numpy as jnp
import numpy as np
from jax.experimental import pallas as pl
from jax.experimental.pallas import tpu as pltpu


def _bev_pool_kernel(tile_ids_ref, counts_ref, prep_ref, bev_ref, *rest,
                     W, TH, compress, fold, compute_dtype):
    if compress:
        wt_ref, shift_ref, out_ref, acc_ref = rest
    else:
        out_ref, acc_ref = rest

    b = pl.program_id(1)
    t = pl.program_id(2)
    n_t = pl.num_programs(2)

    @pl.when(t == 0)
    def _init():
        acc_ref[...] = jnp.zeros_like(acc_ref)

    # Padded reduction steps (t >= this batch's non-empty-tile count) repeat the
    # previous tile id (so their DMA is elided) and skip all compute here.
    @pl.when(t < counts_ref[b])
    def _accumulate():
        prep = prep_ref[0]                          # (8, NC) f32, resident per b
        x0f, x1f = prep[0:1, :], prep[1:2, :]       # clamped corner cols (float)
        y0f, y1f = prep[2:3, :], prep[3:4, :]       # clamped corner rows (float)
        wx0, wx1 = prep[4:5, :], prep[5:6, :]       # fractional col weights
        wy0, wy1 = prep[6:7, :], prep[7:8, :]       # fractional row weights

        # Separable bilinear weights for this tile of TH full BEV rows.
        # Coincident clamped corners sum to (x1-x0)==0 / (y1-y0)==0, exactly
        # matching the clamp-based torch reference.
        r0 = tile_ids_ref[b, t] * TH
        rows = (jax.lax.broadcasted_iota(jnp.int32, (TH, 1), 0) + r0
                ).astype(jnp.float32)                                   # (TH, 1)
        cols = jax.lax.broadcasted_iota(jnp.int32, (W, 1), 0
                                        ).astype(jnp.float32)           # (W, 1)
        wy = (jnp.where(rows == y0f, wy0, 0.0)
              + jnp.where(rows == y1f, wy1, 0.0))                       # (TH, NC)
        wx = (jnp.where(cols == x0f, wx0, 0.0)
              + jnp.where(cols == x1f, wx1, 0.0))                       # (W, NC)
        s3 = wy[:, None, :] * wx[None, :, :]                            # (TH, W, NC)
        # Leading-dim merge (last dim unchanged) -> cheap when W % 8 == 0.
        s = s3.reshape(TH * W, s3.shape[2]).astype(compute_dtype)       # (T, NC)

        bev = bev_ref[0]                                                # (C_in, T)
        if compress and fold:
            # (W_s @ bev_tile) @ S == W_s @ (bev_tile @ S); fold only when C_in
            # is small so the big contraction is not starved at C_out rows.
            bev = jnp.dot(wt_ref[...], bev,
                          preferred_element_type=jnp.float32
                          ).astype(compute_dtype)                       # (C_out, T)
        acc_ref[...] += jnp.dot(bev, s, preferred_element_type=jnp.float32)

    @pl.when(t == n_t - 1)
    def _finalize():
        z = acc_ref[...]
        if compress:
            if not fold:                            # apply compress head once
                z = jnp.dot(wt_ref[...], z, preferred_element_type=jnp.float32)
            z = jnp.maximum(z + shift_ref[...], 0.0)    # folded BN shift + ReLU
        out_ref[0] = z.astype(out_ref.dtype)


def _vmem_budget_bytes():
    """Generation-aware VMEM budget (v7x has a 64 MiB/TC physical ceiling)."""
    try:
        cap = int(pltpu.get_tpu_info().vmem_capacity_bytes)
    except Exception:                 # non-TPU tracing / older API: assume 128 MiB
        cap = 128 << 20
    if cap <= (64 << 20):
        return 40 << 20               # v7x-class: leave ~24 MiB headroom
    return min(96 << 20, (cap * 3) // 4)   # v5e / v6e: 128 MiB physical


def _tile_vmem_bytes(th, W, c_in, n, itemsize):
    t = th * W
    return (2 * c_in * t * itemsize          # double-buffered bev block
            + t * n * (4 + itemsize)         # f32 weight tile + compute-dtype cast
            + 4 * (th + W) * n * 4)          # wx / wy and compare temporaries


def _pick_rows_per_tile(H, W, c_in, n, itemsize, budget):
    """Largest row-tile height TH (dividing H, TH*W lane-aligned or the whole
    map) whose per-tile VMEM footprint fits the budget."""
    cands = [th for th in range(1, H + 1)
             if H % th == 0 and ((th * W) % 128 == 0 or th == H)]
    fits = [th for th in cands
            if _tile_vmem_bytes(th, W, c_in, n, itemsize) <= budget]
    return max(fits) if fits else min(cands)


def bev_grid_pooling(keypoints, bev_nchw, params, *, point_cloud_range,
                     voxel_size, bev_stride, rows_per_tile=None,
                     compute_dtype=jnp.bfloat16, kp_split=None,
                     bev_buffers=None):
    """Forward pass of BEVGridPooling.

    params: None (IN_CHANNELS == OUT_CHANNELS, identity compress head) or
            (w, gamma, beta, rmean, rvar, eps) for Linear(no bias)+BN1d+ReLU.
    """
    B, N, _ = keypoints.shape
    _, C_in, H, W = bev_nchw.shape
    HW = H * W

    x_off = float(point_cloud_range[0])
    y_off = float(point_cloud_range[1])
    sx = float(voxel_size[0])
    sy = float(voxel_size[1])
    stride = float(bev_stride)

    compress = params is not None
    if compress:
        w, gamma, beta, rmean, rvar, eps = params
        C_out = w.shape[0]
        scale = gamma / jnp.sqrt(rvar + eps)                   # (C_out,)
        wt_scaled = (w * scale[:, None]).astype(jnp.float32)   # (C_out, C_in)
        shift = (beta - rmean * scale).reshape(C_out, 1).astype(jnp.float32)
        fold = C_in < 128          # shape-aware: fold only for small C_in
    else:
        C_out = C_in
        fold = False
    C_acc = C_out if (not compress or fold) else C_in

    # Lane-dense keypoint axis: pad N up to a multiple of 128.
    Np = max(128, -(-N // 128) * 128)
    if kp_split is None:
        kp_split = 2 if (B == 1 and Np >= 256) else 1   # v7x dual-TC when B==1
    assert Np % kp_split == 0 and (Np // kp_split) % 128 == 0, (Np, kp_split)
    NC = Np // kp_split

    # --- hoisted per-keypoint prep (exactly the torch bilinear math, f32) ---
    kx = keypoints[:, :, 0].astype(jnp.float32)
    ky = keypoints[:, :, 1].astype(jnp.float32)
    x = (kx - x_off) / sx / stride
    y = (ky - y_off) / sy / stride
    x0f = jnp.clip(jnp.floor(x), 0.0, float(W - 1))
    x1f = jnp.clip(jnp.floor(x) + 1.0, 0.0, float(W - 1))
    y0f = jnp.clip(jnp.floor(y), 0.0, float(H - 1))
    y1f = jnp.clip(jnp.floor(y) + 1.0, 0.0, float(H - 1))
    prep = jnp.stack([x0f, x1f, y0f, y1f,
                      x1f - x, x - x0f, y1f - y, y - y0f], axis=1)  # (B, 8, N)
    if Np > N:  # padded keypoints: impossible corner index -> zero weights
        idx_pad = jnp.full((B, 4, Np - N), -1.0, jnp.float32)
        w_pad = jnp.zeros((B, 4, Np - N), jnp.float32)
        prep = jnp.concatenate(
            [jnp.concatenate([prep[:, :4], idx_pad], axis=2),
             jnp.concatenate([prep[:, 4:], w_pad], axis=2)], axis=1)

    # --- tiling (generation-aware VMEM budget) ---
    itemsize = jnp.dtype(compute_dtype).itemsize
    budget = _vmem_budget_bytes()
    fixed = 4 * (C_acc * NC + 2 * C_out * NC + 2 * 8 * NC + C_out * C_in + C_out)
    if rows_per_tile is None:
        rows_per_tile = _pick_rows_per_tile(
            H, W, C_in, NC, itemsize, budget - fixed - (4 << 20))
    TH = int(rows_per_tile)
    assert H % TH == 0 and ((TH * W) % 128 == 0 or TH == H), (H, W, TH)
    T = TH * W
    num_row_tiles = H // TH

    # --- per-batch compacted list of non-empty row tiles (exact skip: a row
    #     tile with no y0/y1 corner row contributes all-zero weights) ---
    # TODO(synk): one-hot membership is O(B*N*num_row_tiles); use a bincount /
    # scatter-add for production-sized grids.
    tid = jnp.arange(num_row_tiles, dtype=jnp.int32)
    rt0 = (y0f.astype(jnp.int32) // TH)[..., None]            # (B, N, 1)
    rt1 = (y1f.astype(jnp.int32) // TH)[..., None]
    hits = ((rt0 == tid) | (rt1 == tid)).any(axis=1)          # (B, num_row_tiles)
    counts = hits.sum(axis=1).astype(jnp.int32)               # (B,)
    order = jnp.argsort(jnp.where(hits, tid, num_row_tiles + tid),
                        axis=1).astype(jnp.int32)             # non-empty first
    try:
        max_steps = max(int(jax.device_get(jnp.max(counts))), 1)
    except Exception:   # traced wrapper: fall back to the static full extent
        max_steps = num_row_tiles
    take = jnp.maximum(
        jnp.minimum(jnp.arange(max_steps, dtype=jnp.int32)[None, :],
                    counts[:, None] - 1), 0)
    tile_ids = jnp.take_along_axis(order, take, axis=1)        # (B, max_steps)

    # --- kernel inputs (free HBM reshape; bf16 stream of the BEV map) ---
    bev_cm = bev_nchw.reshape(B, C_in, HW).astype(compute_dtype)

    bev_spec_kwargs = {}
    if bev_buffers is not None:        # e.g. 3 on v5e if DMA latency is exposed
        bev_spec_kwargs["pipeline_mode"] = pl.Buffered(bev_buffers)

    in_specs = [
        pl.BlockSpec((1, 8, NC), lambda s, b, t, tids, cnts: (b, 0, s)),
        pl.BlockSpec((1, C_in, T),
                     lambda s, b, t, tids, cnts: (b, 0, tids[b, t]),
                     **bev_spec_kwargs),
    ]
    args = [prep, bev_cm]
    if compress:
        wt_k = wt_scaled.astype(compute_dtype) if fold else wt_scaled
        in_specs += [
            pl.BlockSpec((C_out, C_in), lambda s, b, t, tids, cnts: (0, 0)),
            pl.BlockSpec((C_out, 1), lambda s, b, t, tids, cnts: (0, 0)),
        ]
        args += [wt_k, shift]

    kernel = functools.partial(
        _bev_pool_kernel, W=W, TH=TH, compress=compress, fold=fold,
        compute_dtype=compute_dtype)

    out = pl.pallas_call(
        kernel,
        out_shape=jax.ShapeDtypeStruct((B, C_out, Np), jnp.float32),
        grid_spec=pltpu.PrefetchScalarGridSpec(
            num_scalar_prefetch=2,
            grid=(kp_split, B, max_steps),
            in_specs=in_specs,
            out_specs=pl.BlockSpec((1, C_out, NC),
                                   lambda s, b, t, tids, cnts: (b, 0, s)),
            scratch_shapes=[pltpu.VMEM((C_acc, NC), jnp.float32)]),
        compiler_params=pltpu.CompilerParams(
            dimension_semantics=("parallel", "parallel", "arbitrary"),
            vmem_limit_bytes=int(budget)),
    )(tile_ids, counts, *args)

    # (B, C_out, Np) -> (B, N, C_out) to match the torch module's output layout.
    return jnp.transpose(out, (0, 2, 1))[:, :N, :]


def _ref_forward(keypoints, bev_nchw, params, point_cloud_range, voxel_size,
                 bev_stride):
    """Pure-JAX replica of the PyTorch module (eval-mode BN), for verification."""
    B, C, H, W = bev_nchw.shape
    x_idxs = (keypoints[:, :, 0] - point_cloud_range[0]) / voxel_size[0] / bev_stride
    y_idxs = (keypoints[:, :, 1] - point_cloud_range[1]) / voxel_size[1] / bev_stride
    outs = []
    for k in range(B):
        im = jnp.transpose(bev_nchw[k], (1, 2, 0))            # (H, W, C)
        x, y = x_idxs[k], y_idxs[k]
        x0 = jnp.clip(jnp.floor(x).astype(jnp.int32), 0, W - 1)
        x1 = jnp.clip(jnp.floor(x).astype(jnp.int32) + 1, 0, W - 1)
        y0 = jnp.clip(jnp.floor(y).astype(jnp.int32), 0, H - 1)
        y1 = jnp.clip(jnp.floor(y).astype(jnp.int32) + 1, 0, H - 1)
        Ia, Ib, Ic, Id = im[y0, x0], im[y1, x0], im[y0, x1], im[y1, x1]
        wa = (x1.astype(x.dtype) - x) * (y1.astype(y.dtype) - y)
        wb = (x1.astype(x.dtype) - x) * (y - y0.astype(y.dtype))
        wc = (x - x0.astype(x.dtype)) * (y1.astype(y.dtype) - y)
        wd = (x - x0.astype(x.dtype)) * (y - y0.astype(y.dtype))
        ans = (Ia * wa[:, None] + Ib * wb[:, None]
               + Ic * wc[:, None] + Id * wd[:, None])
        outs.append(ans[None])
    feats = jnp.concatenate(outs, axis=0)                     # (B, N, C)
    if params is not None:
        w, gamma, beta, rmean, rvar, eps = params
        z = feats.reshape(-1, C) @ w.T
        z = (z - rmean) / jnp.sqrt(rvar + eps) * gamma + beta
        z = jnp.maximum(z, 0.0)
        feats = z.reshape(B, feats.shape[1], -1)
    return feats


if __name__ == "__main__":
    B, N = 2, 32
    C_in, C_out = 32, 16
    H = W = 16
    point_cloud_range = (-4.0, -4.0, -3.0, 4.0, 4.0, 1.0)
    voxel_size = (0.5, 0.5, 0.2)
    bev_stride = 1
    eps = 1e-3

    key = jax.random.PRNGKey(0)
    k_kp, k_bev, k_w, k_g, k_b, k_rm, k_rv, k_kp2 = jax.random.split(key, 8)

    kp_xy = jax.random.uniform(k_kp, (B, N, 2), jnp.float32, -4.5, 4.5)
    keypoints = jnp.concatenate([kp_xy, jnp.zeros((B, N, 1), jnp.float32)], -1)
    bev_nchw = jax.random.normal(k_bev, (B, C_in, H, W), jnp.float32)

    w = jax.random.normal(k_w, (C_out, C_in), jnp.float32) * 0.1
    gamma = jax.random.uniform(k_g, (C_out,), jnp.float32, 0.5, 1.5)
    beta = jax.random.normal(k_b, (C_out,), jnp.float32) * 0.1
    rmean = jax.random.normal(k_rm, (C_out,), jnp.float32) * 0.1
    rvar = jax.random.uniform(k_rv, (C_out,), jnp.float32, 0.5, 1.5)
    params = (w, gamma, beta, rmean, rvar, eps)

    common = dict(point_cloud_range=point_cloud_range, voxel_size=voxel_size,
                  bev_stride=bev_stride)

    ref_c = _ref_forward(keypoints, bev_nchw, params, point_cloud_range,
                         voxel_size, bev_stride)
    ref_i = _ref_forward(keypoints, bev_nchw, None, point_cloud_range,
                         voxel_size, bev_stride)

    # 1) exact f32 path, forced 2-row-tile reduction (multi-step accumulator +
    #    compacted non-empty-tile routing).
    out = jax.block_until_ready(bev_grid_pooling(
        keypoints, bev_nchw, params, rows_per_tile=8,
        compute_dtype=jnp.float32, **common))
    assert out.shape == (B, N, C_out), out.shape
    np.testing.assert_allclose(np.asarray(out), np.asarray(ref_c),
                               rtol=1e-4, atol=1e-4)

    # 2) default bf16 path, auto tile size (single-tile reduction).
    out2 = jax.block_until_ready(bev_grid_pooling(keypoints, bev_nchw, params,
                                                  **common))
    np.testing.assert_allclose(np.asarray(out2), np.asarray(ref_c),
                               rtol=1e-2, atol=3e-2)

    # 3) identity compress head (IN_CHANNELS == OUT_CHANNELS), bf16, 2 row tiles.
    out3 = jax.block_until_ready(bev_grid_pooling(keypoints, bev_nchw, None,
                                                  rows_per_tile=8, **common))
    assert out3.shape == (B, N, C_in), out3.shape
    np.testing.assert_allclose(np.asarray(out3), np.asarray(ref_i),
                               rtol=1e-2, atol=3e-2)

    # 4) larger keypoint count with forced kp_split=2 leading parallel axis
    #    (v7x dual-TensorCore path; Np = 256 -> two lane-dense 128 chunks).
    N2 = 200
    kp2_xy = jax.random.uniform(k_kp2, (B, N2, 2), jnp.float32, -4.5, 4.5)
    keypoints2 = jnp.concatenate([kp2_xy, jnp.zeros((B, N2, 1), jnp.float32)], -1)
    ref_c2 = _ref_forward(keypoints2, bev_nchw, params, point_cloud_range,
                          voxel_size, bev_stride)
    out4 = jax.block_until_ready(bev_grid_pooling(
        keypoints2, bev_nchw, params, rows_per_tile=8, kp_split=2, **common))
    assert out4.shape == (B, N2, C_out), out4.shape
    np.testing.assert_allclose(np.asarray(out4), np.asarray(ref_c2),
                               rtol=1e-2, atol=3e-2)

    # 5) C_in >= 128: shape-aware unfold path (accumulate at C_in width, apply
    #    the compress head once in finalize).
    C_in2 = 128
    k_bev2, k_w2 = jax.random.split(k_bev, 2)
    bev2 = jax.random.normal(k_bev2, (B, C_in2, H, W), jnp.float32)
    w2 = jax.random.normal(k_w2, (C_out, C_in2), jnp.float32) * 0.1
    params2 = (w2, gamma, beta, rmean, rvar, eps)
    ref_c3 = _ref_forward(keypoints, bev2, params2, point_cloud_range,
                          voxel_size, bev_stride)
    out5 = jax.block_until_ready(bev_grid_pooling(
        keypoints, bev2, params2, rows_per_tile=8, **common))
    np.testing.assert_allclose(np.asarray(out5), np.asarray(ref_c3),
                               rtol=1e-2, atol=3e-2)

    print("KERNEL_OK")
</pallas_src>

<mosaic_0001>
module attributes {stable_mosaic.version = 11 : i64} {
  func.func @_bev_pool_kernel(%arg0: i32, %arg1: i32, %arg2: i32, %arg3: memref<2x2xi32, #tpu.memory_space<smem>>, %arg4: memref<2xi32, #tpu.memory_space<smem>>, %arg5: memref<1x8x128xf32, #tpu.memory_space<vmem>>, %arg6: memref<1x32x128xf32, #tpu.memory_space<vmem>>, %arg7: memref<16x32xf32, #tpu.memory_space<vmem>>, %arg8: memref<16x1xf32, #tpu.memory_space<vmem>>, %arg9: memref<1x16x128xf32, #tpu.memory_space<vmem>>, %arg10: memref<16x128xf32, #tpu.memory_space<vmem>>) attributes {dimension_semantics = [#tpu.dimension_semantics<parallel>, #tpu.dimension_semantics<parallel>, #tpu.dimension_semantics<arbitrary>], iteration_bounds = array<i64: 1, 2, 2>, scalar_prefetch = 2 : i64, scratch_operands = 1 : i64, tpu.core_type = #tpu.core_type<tc>, window_params = [{transform_indices = @transform_0, window_bounds = array<i64: 1, 8, 128>}, {transform_indices = @transform_1, window_bounds = array<i64: 1, 32, 128>}, {pipeline_mode = #tpu.pipeline_mode<synchronous>, transform_indices = @transform_2, window_bounds = array<i64: 16, 32>}, {pipeline_mode = #tpu.pipeline_mode<synchronous>, transform_indices = @transform_3, window_bounds = array<i64: 16, 1>}, {transform_indices = @transform_4, window_bounds = array<i64: 1, 16, 128>}]} {
    %c0_i32 = arith.constant 0 : i32
    %0 = arith.cmpi eq, %arg2, %c0_i32 : i32
    %1 = arith.extui %0 : i1 to i32
    %c0_i32_0 = arith.constant 0 : i32
    %2 = arith.cmpi ne, %1, %c0_i32_0 : i32
    scf.if %2 {
      %cst = arith.constant 0.000000e+00 : f32
      %11 = vector.broadcast %cst : f32 to vector<16x128xf32>
      %c0 = arith.constant 0 : index
      %c0_3 = arith.constant 0 : index
      %12 = vector.load %arg10[%c0, %c0_3] : memref<16x128xf32, #tpu.memory_space<vmem>>, vector<16x128xf32>
      tpu.vector_store %arg10[%c0, %c0_3], %11 {strides = array<i32>} : memref<16x128xf32, #tpu.memory_space<vmem>>, vector<16x128xf32>,
    } else {
    }
    %3 = arith.index_cast %arg1 : i32 to index
    %4 = memref.load %arg4[%3] : memref<2xi32, #tpu.memory_space<smem>>
    %5 = arith.cmpi slt, %arg2, %4 : i32
    %6 = arith.extui %5 : i1 to i32
    %c0_i32_1 = arith.constant 0 : i32
    %7 = arith.cmpi ne, %6, %c0_i32_1 : i32
    scf.if %7 {
      %c0 = arith.constant 0 : index
      %c0_3 = arith.constant 0 : index
      %c0_4 = arith.constant 0 : index
      %11 = vector.load %arg5[%c0, %c0_3, %c0_4] : memref<1x8x128xf32, #tpu.memory_space<vmem>>, vector<1x8x128xf32>
      %12 = vector.shape_cast %11 : vector<1x8x128xf32> to vector<8x128xf32>
      %13 = vector.extract_strided_slice %12 {offsets = [0, 0], sizes = [1, 128], strides = [1, 1]} : vector<8x128xf32> to vector<1x128xf32>
      %14 = vector.extract_strided_slice %12 {offsets = [1, 0], sizes = [1, 128], strides = [1, 1]} : vector<8x128xf32> to vector<1x128xf32>
      %15 = vector.extract_strided_slice %12 {offsets = [2, 0], sizes = [1, 128], strides = [1, 1]} : vector<8x128xf32> to vector<1x128xf32>
      %16 = vector.extract_strided_slice %12 {offsets = [3, 0], sizes = [1, 128], strides = [1, 1]} : vector<8x128xf32> to vector<1x128xf32>
      %17 = vector.extract_strided_slice %12 {offsets = [4, 0], sizes = [1, 128], strides = [1, 1]} : vector<8x128xf32> to vector<1x128xf32>
      %18 = vector.extract_strided_slice %12 {offsets = [5, 0], sizes = [1, 128], strides = [1, 1]} : vector<8x128xf32> to vector<1x128xf32>
      %19 = vector.extract_strided_slice %12 {offsets = [6, 0], sizes = [1, 128], strides = [1, 1]} : vector<8x128xf32> to vector<1x128xf32>
      %20 = vector.extract_strided_slice %12 {offsets = [7, 0], sizes = [1, 128], strides = [1, 1]} : vector<8x128xf32> to vector<1x128xf32>
      %21 = arith.index_cast %arg1 : i32 to index
      %22 = arith.index_cast %arg2 : i32 to index
      %23 = memref.load %arg3[%21, %22] : memref<2x2xi32, #tpu.memory_space<smem>>
      %c8_i32 = arith.constant 8 : i32
      %24 = arith.muli %23, %c8_i32 : i32
      %25 = tpu.iota {dimensions = array<i32: 0>} : vector<8x1xi32>
      %26 = vector.broadcast %24 : i32 to vector<8x1xi32>
      %27 = arith.addi %25, %26 : vector<8x1xi32>
      %28 = arith.sitofp %27 : vector<8x1xi32> to vector<8x1xf32>
      %29 = tpu.iota {dimensions = array<i32: 0>} : vector<16x1xi32>
      %30 = arith.sitofp %29 : vector<16x1xi32> to vector<16x1xf32>
      %31 = vector.broadcast %28 : vector<8x1xf32> to vector<8x128xf32>
      %32 = vector.broadcast %15 : vector<1x128xf32> to vector<8x128xf32>
      %33 = arith.cmpf oeq, %31, %32 : vector<8x128xf32>
      %cst = arith.constant 0.000000e+00 : f32
      %34 = vector.shape_cast %19 : vector<1x128xf32> to vector<1x128xf32>
      %35 = vector.broadcast %34 : vector<1x128xf32> to vector<8x128xf32>
      %36 = vector.broadcast %cst : f32 to vector<8x128xf32>
      %37 = arith.select %33, %35, %36 : vector<8x128xi1>, vector<8x128xf32>
      %38 = vector.broadcast %28 : vector<8x1xf32> to vector<8x128xf32>
      %39 = vector.broadcast %16 : vector<1x128xf32> to vector<8x128xf32>
      %40 = arith.cmpf oeq, %38, %39 : vector<8x128xf32>
      %cst_5 = arith.constant 0.000000e+00 : f32
      %41 = vector.shape_cast %20 : vector<1x128xf32> to vector<1x128xf32>
      %42 = vector.broadcast %41 : vector<1x128xf32> to vector<8x128xf32>
      %43 = vector.broadcast %cst_5 : f32 to vector<8x128xf32>
      %44 = arith.select %40, %42, %43 : vector<8x128xi1>, vector<8x128xf32>
      %45 = arith.addf %37, %44 : vector<8x128xf32>
      %46 = vector.broadcast %30 : vector<16x1xf32> to vector<16x128xf32>
      %47 = vector.broadcast %13 : vector<1x128xf32> to vector<16x128xf32>
      %48 = arith.cmpf oeq, %46, %47 : vector<16x128xf32>
      %cst_6 = arith.constant 0.000000e+00 : f32
      %49 = vector.shape_cast %17 : vector<1x128xf32> to vector<1x128xf32>
      %50 = vector.broadcast %49 : vector<1x128xf32> to vector<16x128xf32>
      %51 = vector.broadcast %cst_6 : f32 to vector<16x128xf32>
      %52 = arith.select %48, %50, %51 : vector<16x128xi1>, vector<16x128xf32>
      %53 = vector.broadcast %30 : vector<16x1xf32> to vector<16x128xf32>
      %54 = vector.broadcast %14 : vector<1x128xf32> to vector<16x128xf32>
      %55 = arith.cmpf oeq, %53, %54 : vector<16x128xf32>
      %cst_7 = arith.constant 0.000000e+00 : f32
      %56 = vector.shape_cast %18 : vector<1x128xf32> to vector<1x128xf32>
      %57 = vector.broadcast %56 : vector<1x128xf32> to vector<16x128xf32>
      %58 = vector.broadcast %cst_7 : f32 to vector<16x128xf32>
      %59 = arith.select %55, %57, %58 : vector<16x128xi1>, vector<16x128xf32>
      %60 = arith.addf %52, %59 : vector<16x128xf32>
      %61 = vector.shape_cast %45 : vector<8x128xf32> to vector<8x1x128xf32>
      %62 = vector.shape_cast %60 : vector<16x128xf32> to vector<1x16x128xf32>
      %63 = vector.broadcast %61 : vector<8x1x128xf32> to vector<8x16x128xf32>
      %64 = vector.broadcast %62 : vector<1x16x128xf32> to vector<8x16x128xf32>
      %65 = arith.mulf %63, %64 : vector<8x16x128xf32>
      %66 = vector.shape_cast %65 : vector<8x16x128xf32> to vector<128x128xf32>
      %c0_8 = arith.constant 0 : index
      %c0_9 = arith.constant 0 : index
      %c0_10 = arith.constant 0 : index
      %67 = vector.load %arg6[%c0_8, %c0_9, %c0_10] : memref<1x32x128xf32, #tpu.memory_space<vmem>>, vector<1x32x128xf32>
      %68 = vector.shape_cast %67 : vector<1x32x128xf32> to vector<32x128xf32>
      %c0_11 = arith.constant 0 : index
      %c0_12 = arith.constant 0 : index
      %69 = vector.load %arg7[%c0_11, %c0_12] : memref<16x32xf32, #tpu.memory_space<vmem>>, vector<16x32xf32>
      %cst_13 = arith.constant dense<0.000000e+00> : vector<16x128xf32>
      %70 = tpu.matmul %69, %68, %cst_13 {dimension_numbers = #tpu.dot_dimension_numbers<[1], [0], [0], [1], [0, 0, 1, 1], [], []>} : vector<16x32xf32>, vector<32x128xf32>, vector<16x128xf32> -> vector<16x128xf32>
      %c0_14 = arith.constant 0 : index
      %c0_15 = arith.constant 0 : index
      %71 = vector.load %arg10[%c0_14, %c0_15] : memref<16x128xf32, #tpu.memory_space<vmem>>, vector<16x128xf32>
      %cst_16 = arith.constant dense<0.000000e+00> : vector<16x128xf32>
      %72 = tpu.matmul %70, %66, %cst_16 {dimension_numbers = #tpu.dot_dimension_numbers<[1], [0], [0], [1], [0, 0, 1, 1], [], []>} : vector<16x128xf32>, vector<128x128xf32>, vector<16x128xf32> -> vector<16x128xf32>
      %73 = arith.addf %71, %72 : vector<16x128xf32>
      %c0_17 = arith.constant 0 : index
      %c0_18 = arith.constant 0 : index
      %74 = vector.load %arg10[%c0_17, %c0_18] : memref<16x128xf32, #tpu.memory_space<vmem>>, vector<16x128xf32>
      tpu.vector_store %arg10[%c0_17, %c0_18], %73 {strides = array<i32>} : memref<16x128xf32, #tpu.memory_space<vmem>>, vector<16x128xf32>,
    } else {
    }
    %c1_i32 = arith.constant 1 : i32
    %8 = arith.cmpi eq, %arg2, %c1_i32 : i32
    %9 = arith.extui %8 : i1 to i32
    %c0_i32_2 = arith.constant 0 : i32
    %10 = arith.cmpi ne, %9, %c0_i32_2 : i32
    scf.if %10 {
      %c0 = arith.constant 0 : index
      %c0_3 = arith.constant 0 : index
      %11 = vector.load %arg10[%c0, %c0_3] : memref<16x128xf32, #tpu.memory_space<vmem>>, vector<16x128xf32>
      %c0_4 = arith.constant 0 : index
      %c0_5 = arith.constant 0 : index
      %12 = vector.load %arg8[%c0_4, %c0_5] : memref<16x1xf32, #tpu.memory_space<vmem>>, vector<16x1xf32>
      %13 = vector.broadcast %12 : vector<16x1xf32> to vector<16x128xf32>
      %14 = arith.addf %11, %13 : vector<16x128xf32>
      %cst = arith.constant 0.000000e+00 : f32
      %15 = vector.broadcast %cst : f32 to vector<16x128xf32>
      %16 = arith.maximumf %14, %15 : vector<16x128xf32>
      %c0_6 = arith.constant 0 : index
      %c0_7 = arith.constant 0 : index
      %c0_8 = arith.constant 0 : index
      %17 = vector.load %arg9[%c0_6, %c0_7, %c0_8] : memref<1x16x128xf32, #tpu.memory_space<vmem>>, vector<1x16x128xf32>
      %18 = vector.shape_cast %17 : vector<1x16x128xf32> to vector<16x128xf32>
      %19 = vector.shape_cast %16 : vector<16x128xf32> to vector<1x16x128xf32>
      tpu.vector_store %arg9[%c0_6, %c0_7, %c0_8], %19 {strides = array<i32>} : memref<1x16x128xf32, #tpu.memory_space<vmem>>, vector<1x16x128xf32>,
    } else {
    }
    return
  }
  func.func @transform_0(%arg0: i32, %arg1: i32, %arg2: i32, %arg3: memref<2x2xi32, #tpu.memory_space<smem>>, %arg4: memref<2xi32, #tpu.memory_space<smem>>) -> (i32, i32, i32) {
    %c0_i32 = arith.constant 0 : i32
    %c0_i32_0 = arith.constant 0 : i32
    return %arg1, %c0_i32, %arg0 : i32, i32, i32
  }
  func.func @transform_1(%arg0: i32, %arg1: i32, %arg2: i32, %arg3: memref<2x2xi32, #tpu.memory_space<smem>>, %arg4: memref<2xi32, #tpu.memory_space<smem>>) -> (i32, i32, i32) {
    %0 = arith.index_cast %arg1 : i32 to index
    %1 = arith.index_cast %arg2 : i32 to index
    %2 = memref.load %arg3[%0, %1] : memref<2x2xi32, #tpu.memory_space<smem>>
    %c0_i32 = arith.constant 0 : i32
    %c0_i32_0 = arith.constant 0 : i32
    return %arg1, %c0_i32, %2 : i32, i32, i32
  }
  func.func @transform_2(%arg0: i32, %arg1: i32, %arg2: i32, %arg3: memref<2x2xi32, #tpu.memory_space<smem>>, %arg4: memref<2xi32, #tpu.memory_space<smem>>) -> (i32, i32) {
    %c0_i32 = arith.constant 0 : i32
    %c0_i32_0 = arith.constant 0 : i32
    %c0_i32_1 = arith.constant 0 : i32
    return %c0_i32, %c0_i32_0 : i32, i32
  }
  func.func @transform_3(%arg0: i32, %arg1: i32, %arg2: i32, %arg3: memref<2x2xi32, #tpu.memory_space<smem>>, %arg4: memref<2xi32, #tpu.memory_space<smem>>) -> (i32, i32) {
    %c0_i32 = arith.constant 0 : i32
    %c0_i32_0 = arith.constant 0 : i32
    %c0_i32_1 = arith.constant 0 : i32
    return %c0_i32, %c0_i32_0 : i32, i32
  }
  func.func @transform_4(%arg0: i32, %arg1: i32, %arg2: i32, %arg3: memref<2x2xi32, #tpu.memory_space<smem>>, %arg4: memref<2xi32, #tpu.memory_space<smem>>) -> (i32, i32, i32) {
    %c0_i32 = arith.constant 0 : i32
    %c0_i32_0 = arith.constant 0 : i32
    return %arg1, %c0_i32, %arg0 : i32, i32, i32
  }
}

</mosaic_0001>

<llo_original>
// kernel: tpu_custom_call.1
$region0: #{tpu_custom_call.1}
  #allocation0 [shape = 'u32[]', space=smem, size = 0x4, offset = 0x4, fixed_abs, tag = 'smem constant byte address 0x4 - core index']
  #allocation1 [shape = 'u32[144,128]{1,0:T(1,128)}', space=vmem, size = 0x12000, scoped, tag = 'internal scratch']
  #allocation2 [shape = 'f32[16,128]{1,0:T(8,128)}', space=vmem, size = 0x2000, scoped, tag = 'scratch operand']
  #allocation3 [shape = 's32[1]{0}', space=sflag, size = 0x4, scoped, tag = 'scoped memory for tpu_custom_call.1']
  #allocation4 [shape = 'u8[1024]{0}', space=smem, size = 0x400, scoped, tag = 'prefetched SMEM operand 0']
  #allocation5 [shape = 'u8[512]{0}', space=smem, size = 0x200, scoped, tag = 'prefetched SMEM operand 1']
  %s0 = inlined_call_operand.vmem [shape: s32[2,2], index: 0, kind: input, shape index: {}]
  %s1 = inlined_call_operand.vmem [shape: s32[2], index: 1, kind: input, shape index: {}]
  %s2 = inlined_call_operand.vmem [shape: f32[2,8,128], index: 2, kind: input, shape index: {}]
  %s3 = inlined_call_operand.hbm [shape: f32[2,32,256], index: 3, kind: input, shape index: {}]
  %s4 = inlined_call_operand.hbm [shape: f32[16,32], index: 4, kind: input, shape index: {}]
  %s5 = inlined_call_operand.vmem [shape: f32[16,1], index: 5, kind: input, shape index: {}]
  %s6 = inlined_call_operand.hbm [shape: f32[2,16,128], index: 6, kind: output, shape index: {}]
  %s7 = sld [smem:[#allocation0]]
  $region69: #{tpu_custom_call.1} parent=0
    _
  %s9 = ssub.s32 1, %s7
  %s10 = scalar_select 0, %s9, %s7
  %s11 = sshll.u32 %s0, 4
  %s12 = int_to_ptr.vmem [resolvable:$true] %s11
  %14 = dma.vmem_to_smem %s12, 32, [#allocation4], [#allocation3]
  %s15 = sshll.u32 %s1, 4
  %s16 = int_to_ptr.vmem [resolvable:$true] %s15
  %18 = dma.vmem_to_smem %s16, 16, [#allocation5], [#allocation3]
  %19 = dma.done [#allocation3], 48
  %20 = sfence
  $region1: #{tpu_custom_call.1} parent=0
    #allocation6 [shape = 'u8[32768]{0}', space=vmem, size = 0x8000, scoped, tag = 'input window, operand 3']
    #allocation7 [shape = 's32[2]{0}', space=sflag, size = 0x8, scoped, tag = 'scoped memory for tpu_custom_call.1']
    #allocation8 [shape = 's32[2]{0}', space=sflag, size = 0x8, scoped, tag = 'scoped memory for tpu_custom_call.1']
    #allocation9 [shape = 'u8[8192]{0}', space=vmem, size = 0x2000, scoped, tag = 'input window, operand 4, single buffered']
    #allocation10 [shape = 's32[1]{0}', space=sflag, size = 0x4, scoped, tag = 'scoped memory for tpu_custom_call.1']
    #allocation11 [shape = 'u8[16384]{0}', space=vmem, size = 0x4000, scoped, tag = 'output window, operand 0']
    %21 = vsyncpa [#allocation7], 0
    %s22 = scalar_lea.sflag [#allocation7], 1
    %23 = vsyncpa %s22, 0
    %24 = vsyncpa [#allocation10], 0
    %25 = vsyncpa [#allocation8], 0
    %s26 = scalar_lea.sflag [#allocation8], 1
    %27 = vsyncpa %s26, 0
    loop: start=0, step=1, limit=6
    $region2: #{tpu_custom_call.1} parent=1 // loop_pre_header
      _
    $region3: #{tpu_custom_call.1} parent=1 // loop_header
      %s29 = sphi 0, %s33
      %p30 = scmp.ge.s32.totalorder %s29, 6
      %s36 = sphi 0, %s55
      %s37 = sphi 0, %s51
      %s38 = sphi 0, %s47
      %s39 = sphi 0, %s36
      %s40 = sphi 0, %s37
      %s41 = sphi 0, %s38
      %s42 = sphi 0, %s39
      %s43 = sphi 0, %s40
      %s44 = sphi 0, %s41
      %s60 = sphi 0, %s62
      %s63 = sphi 0, %s60
      %s64 = sphi 0, %s63
      %s80 = sphi 0, %s64
      %s104 = sphi 0, %s106
      %s107 = sphi 0, %s104
      %s108 = sphi 0, %s107
      %s124 = sphi 0, %s108
      %s128 = sphi 0, %s128
      %s130 = sphi 0, %s128
      %s131 = sphi 0, %s130
      %s145 = sphi 0, %s131
      %s149 = sphi 0, %s149
      %s151 = sphi 0, %s149
      %s152 = sphi 0, %s151
      %s166 = sphi 0, %s152
      %s174 = sphi 0, %s176
      %s177 = sphi 0, %s174
      %s178 = sphi 0, %s177
      %s194 = sphi 0, %s178
    $region4: #{tpu_custom_call.1} parent=1 // loop_header_branch
      %32 = sbr.rel (%p30) target = $region8
    $region5: #{tpu_custom_call.1} parent=1 // loop_body
      %s34 = ssub.s32 %s29, 1
      %s35 = ssub.s32 %s29, 2
      %s45 = sadd.s32 1, %s38
      %p46 = scmp.ge.s32.totalorder %s45, 2
      %s47 = scalar_select %p46, 0, %s45
      %s48 = sadd.s32 1, %s37
      %s49 = scalar_select %p46, %s48, %s37
      %p50 = scmp.ge.s32.totalorder %s49, 2
      %s51 = scalar_select %p50, 0, %s49
      %s52 = sadd.s32 1, %s36
      %s53 = scalar_select %p50, %s52, %s36
      %p54 = scmp.ge.s32.totalorder %s53, 1
      %s55 = scalar_select %p54, 0, %s53
      %s56 = ssub.s32 %s37, %s51
      %s57 = ssub.s32 %s36, %s55
      %s58 = sor.u32 %s56, %s57
      %p59 = scmp.eq.s32.totalorder %s58, 0
      %s61 = sadd.s32 %s60, 1
      %s62 = scalar_select %p59, %s60, %s61
      %p65 = pneg %p59
      %p66 = scmp.eq.s32.totalorder %s29, 3
      %p67 = por %p65, %p66
      %p68 = scmp.ne.s32.totalorder %s60, %s63
      %p69 = scmp.eq.s32.totalorder %s29, 0
      %p70 = por %p68, %p69
      %p71 = scmp.ne.s32.totalorder %s60, %s63
      %p72 = scmp.eq.s32.totalorder %s34, 3
      %p73 = por %p71, %p72
      %p74 = scmp.ne.s32.totalorder %s63, %s64
      %p75 = scmp.eq.s32.totalorder %s34, 0
      %p76 = por %p74, %p75
      %p77 = scmp.ne.s32.totalorder %s63, %s64
      %p78 = scmp.eq.s32.totalorder %s35, 3
      %p79 = por %p77, %p78
      %p81 = scmp.ne.s32.totalorder %s64, %s80
      %p82 = scmp.eq.s32.totalorder %s35, 0
      %p83 = por %p81, %p82
      %s84 = sshra.s32 %s38, 7
      %s85 = sand.u32 %s38, 127
      %s86 = sadd.s32 %s84, %s37
      %s87 = smul.u32 %s86, 128
      %s88 = sshra.s32 %s38, 7
      %s89 = sand.u32 %s38, 127
      %s90 = sadd.s32 %s87, %s89
      %s91 = sld [smem:[#allocation4 + %s90]]
      %s92 = sshra.s32 %s47, 7
      %s93 = sand.u32 %s47, 127
      %s94 = sadd.s32 %s92, %s51
      %s95 = smul.u32 %s94, 128
      %s96 = sshra.s32 %s47, 7
      %s97 = sand.u32 %s47, 127
      %s98 = sadd.s32 %s95, %s97
      %s99 = sld [smem:[#allocation4 + %s98]]
      %s100 = ssub.s32 %s37, %s51
      %s101 = ssub.s32 %s91, %s99
      %s102 = sor.u32 %s100, %s101
      %p103 = scmp.eq.s32.totalorder %s102, 0
      %s105 = sadd.s32 %s104, 1
      %s106 = scalar_select %p103, %s104, %s105
      %p109 = pneg %p103
      %p110 = scmp.eq.s32.totalorder %s29, 3
      %p111 = por %p109, %p110
      %p112 = scmp.ne.s32.totalorder %s104, %s107
      %p113 = scmp.eq.s32.totalorder %s29, 0
      %p114 = por %p112, %p113
      %p115 = scmp.ne.s32.totalorder %s104, %s107
      %p116 = scmp.eq.s32.totalorder %s34, 3
      %p117 = por %p115, %p116
      %p118 = scmp.ne.s32.totalorder %s107, %s108
      %p119 = scmp.eq.s32.totalorder %s34, 0
      %p120 = por %p118, %p119
      %p121 = scmp.ne.s32.totalorder %s107, %s108
      %p122 = scmp.eq.s32.totalorder %s35, 3
      %p123 = por %p121, %p122
      %p125 = scmp.ne.s32.totalorder %s108, %s124
      %p126 = scmp.eq.s32.totalorder %s35, 0
      %p127 = por %p125, %p126
      %s129 = sadd.s32 %s128, 1
      %p132 = scmp.eq.s32.totalorder %s29, 3
      %p133 = scmp.ne.s32.totalorder %s128, %s130
      %p134 = scmp.eq.s32.totalorder %s29, 0
      %p135 = por %p133, %p134
      %p136 = scmp.ne.s32.totalorder %s128, %s130
      %p137 = scmp.eq.s32.totalorder %s34, 3
      %p138 = por %p136, %p137
      %p139 = scmp.ne.s32.totalorder %s130, %s131
      %p140 = scmp.eq.s32.totalorder %s34, 0
      %p141 = por %p139, %p140
      %p142 = scmp.ne.s32.totalorder %s130, %s131
      %p143 = scmp.eq.s32.totalorder %s35, 3
      %p144 = por %p142, %p143
      %p146 = scmp.ne.s32.totalorder %s131, %s145
      %p147 = scmp.eq.s32.totalorder %s35, 0
      %p148 = por %p146, %p147
      %s150 = sadd.s32 %s149, 1
      %p153 = scmp.eq.s32.totalorder %s29, 3
      %p154 = scmp.ne.s32.totalorder %s149, %s151
      %p155 = scmp.eq.s32.totalorder %s29, 0
      %p156 = por %p154, %p155
      %p157 = scmp.ne.s32.totalorder %s149, %s151
      %p158 = scmp.eq.s32.totalorder %s34, 3
      %p159 = por %p157, %p158
      %p160 = scmp.ne.s32.totalorder %s151, %s152
      %p161 = scmp.eq.s32.totalorder %s34, 0
      %p162 = por %p160, %p161
      %p163 = scmp.ne.s32.totalorder %s151, %s152
      %p164 = scmp.eq.s32.totalorder %s35, 3
      %p165 = por %p163, %p164
      %p167 = scmp.ne.s32.totalorder %s152, %s166
      %p168 = scmp.eq.s32.totalorder %s35, 0
      %p169 = por %p167, %p168
      %s170 = ssub.s32 %s37, %s51
      %s171 = ssub.s32 %s36, %s55
      %s172 = sor.u32 %s170, %s171
      %p173 = scmp.eq.s32.totalorder %s172, 0
      %s175 = sadd.s32 %s174, 1
      %s176 = scalar_select %p173, %s174, %s175
      %p179 = pneg %p173
      %p180 = scmp.eq.s32.totalorder %s29, 3
      %p181 = por %p179, %p180
      %p182 = scmp.ne.s32.totalorder %s174, %s177
      %p183 = scmp.eq.s32.totalorder %s29, 0
      %p184 = por %p182, %p183
      %p185 = scmp.ne.s32.totalorder %s174, %s177
      %p186 = scmp.eq.s32.totalorder %s34, 3
      %p187 = por %p185, %p186
      %p188 = scmp.ne.s32.totalorder %s177, %s178
      %p189 = scmp.eq.s32.totalorder %s34, 0
      %p190 = por %p188, %p189
      %p191 = scmp.ne.s32.totalorder %s177, %s178
      %p192 = scmp.eq.s32.totalorder %s35, 3
      %p193 = por %p191, %p192
      %p195 = scmp.ne.s32.totalorder %s178, %s194
      %p196 = scmp.eq.s32.totalorder %s35, 0
      %p197 = por %p195, %p196
      %p198 = scmp.le.s32.totalorder 1, %s29
      %p199 = scmp.lt.s32.totalorder %s29, 5
      %p200 = pnand %p198, %p199
      %p201 = pneg %p200
      // Predicated region
      $region9: #{tpu_custom_call.1} parent=5 // pred_check
        _
      $region10: #{tpu_custom_call.1} parent=5 // pred_check_branch
        %203 = sbr.rel (%p200) target = $region12
      $region11: #{tpu_custom_call.1} parent=5 // pred_region
        %s204 = ssub.s32 %s29, 1
        // Predicated region
        $region13: #{tpu_custom_call.1} parent=11 // pred_check
          %p205 = pneg %p141
        $region14: #{tpu_custom_call.1} parent=11 // pred_check_branch
          %207 = sbr.rel (%p205) target = $region16
        $region15: #{tpu_custom_call.1} parent=11 // pred_region
          %s209 = ssub.s32 256, 256
          %210 = vsyncadd [#allocation10], %s209
          %s211 = sshll.u32 [#allocation9], 4
          %s212 = int_to_ptr.vmem [resolvable:$true] %s211
          %217 = dma.hbm_to_vmem [thread:$0]  %s4, 256, %s212, [#allocation10], 128, 128, 8
        $region16: #{tpu_custom_call.1} parent=11 // pred_fallthru
          _
        // Predicated region
        $region17: #{tpu_custom_call.1} parent=11 // pred_check
          %p218 = pneg %p162
        $region18: #{tpu_custom_call.1} parent=11 // pred_check_branch
          %220 = sbr.rel (%p218) target = $region20
        $region19: #{tpu_custom_call.1} parent=11 // pred_region
          _
        $region20: #{tpu_custom_call.1} parent=11 // pred_fallthru
          _
      $region12: #{tpu_custom_call.1} parent=5 // pred_fallthru
        _
      %p221 = scmp.lt.s32.totalorder %s29, 4
      // Predicated region
      $region21: #{tpu_custom_call.1} parent=5 // pred_check
        %p222 = pneg %p221
      $region22: #{tpu_custom_call.1} parent=5 // pred_check_branch
        %224 = sbr.rel (%p222) target = $region24
      $region23: #{tpu_custom_call.1} parent=5 // pred_region
        // Predicated region
        $region25: #{tpu_custom_call.1} parent=23 // pred_check
          %p225 = pneg %p70
        $region26: #{tpu_custom_call.1} parent=23 // pred_check_branch
          %227 = sbr.rel (%p225) target = $region28
        $region27: #{tpu_custom_call.1} parent=23 // pred_region
          %p228 = scmp.lt.s32.totalorder %s37, 1
          %s229 = scalar_select %p228, %s37, 1
          %p230 = scmp.lt.s32.totalorder %s36, 0
          %s231 = scalar_select %p230, %s36, 0
          %s232 = sadd.s32 %s231, %s229
          %s233 = smul.addr %s232, 8
          %s234 = scalar_lea.vmem %s2, %s233
        $region28: #{tpu_custom_call.1} parent=23 // pred_fallthru
          _
        // Predicated region
        $region29: #{tpu_custom_call.1} parent=23 // pred_check
          %p235 = pneg %p114
        $region30: #{tpu_custom_call.1} parent=23 // pred_check_branch
          %237 = sbr.rel (%p235) target = $region32
        $region31: #{tpu_custom_call.1} parent=23 // pred_region
          %s238 = sand.u32 %s104, 1
          %s239 = scalar_lea.sflag [#allocation7], %s238
          %s240 = sand.u32 %s104, 1
          %s241 = smul.addr %s240, 32
          %s242 = scalar_lea.vmem [#allocation6], %s241
          %s243 = sshra.s32 %s38, 7
          %s244 = sand.u32 %s38, 127
          %s245 = sadd.s32 %s243, %s37
          %s246 = smul.u32 %s245, 128
          %s247 = sshra.s32 %s38, 7
          %s248 = sand.u32 %s38, 127
          %s249 = sadd.s32 %s246, %s248
          %s250 = sld [smem:[#allocation4 + %s249]]
          %s252 = ssub.s32 512, 512
          %253 = vsyncadd %s239, %s252
          %s254 = smul.addr %s37, 8
          %s255 = sadd.s32 %s250, %s254
          %s256 = smul.addr %s255, 128
          %s257 = scalar_lea.hbm %s3, %s256
          %s258 = sshll.u32 %s242, 4
          %s259 = int_to_ptr.vmem [resolvable:$true] %s258
          %264 = dma.hbm_to_vmem [thread:$0]  %s257, 512, %s259, %s239, 256, 128, 8
        $region32: #{tpu_custom_call.1} parent=23 // pred_fallthru
          _
      $region24: #{tpu_custom_call.1} parent=5 // pred_fallthru
        _
      %p265 = scmp.le.s32.totalorder 1, %s29
      %p266 = scmp.lt.s32.totalorder %s29, 5
      %p267 = pnand %p265, %p266
      %p268 = pneg %p267
      // Predicated region
      $region33: #{tpu_custom_call.1} parent=5 // pred_check
        _
      $region34: #{tpu_custom_call.1} parent=5 // pred_check_branch
        %270 = sbr.rel (%p267) target = $region36
      $region35: #{tpu_custom_call.1} parent=5 // pred_region
        %s271 = ssub.s32 %s29, 1
        %s272 = sand.u32 %s107, 1
        %s273 = scalar_lea.sflag [#allocation7], %s272
        %s274 = sand.u32 %s107, 1
        %s275 = smul.addr %s274, 32
        %s276 = scalar_lea.vmem [#allocation6], %s275
        // Predicated region
        $region37: #{tpu_custom_call.1} parent=35 // pred_check
          %p277 = pneg %p120
        $region38: #{tpu_custom_call.1} parent=35 // pred_check_branch
          %279 = sbr.rel (%p277) target = $region40
        $region39: #{tpu_custom_call.1} parent=35 // pred_region
          %280 = dma.done %s273, 512
        $region40: #{tpu_custom_call.1} parent=35 // pred_fallthru
          _
        // Predicated region
        $region41: #{tpu_custom_call.1} parent=35 // pred_check
          %p281 = pneg %p141
        $region42: #{tpu_custom_call.1} parent=35 // pred_check_branch
          %283 = sbr.rel (%p281) target = $region44
        $region43: #{tpu_custom_call.1} parent=35 // pred_region
          %284 = dma.done [#allocation10], 256
        $region44: #{tpu_custom_call.1} parent=35 // pred_fallthru
          _
        %p285 = scmp.lt.s32.totalorder %s40, 1
        %s286 = scalar_select %p285, %s40, 1
        %p287 = scmp.lt.s32.totalorder %s39, 0
        %s288 = scalar_select %p287, %s39, 0
        %s289 = sadd.s32 %s288, %s286
        %s290 = smul.addr %s289, 8
        %s291 = scalar_lea.vmem %s2, %s290
        %p292 = pneg %p76
        %p293 = pneg %p73
        %s294 = sand.u32 %s107, 1
        %s295 = scalar_lea.sflag [#allocation7], %s294
        %s296 = sand.u32 %s107, 1
        %s297 = smul.addr %s296, 32
        %s298 = scalar_lea.vmem [#allocation6], %s297
        %p299 = pneg %p120
        %p300 = pneg %p117
        %p301 = pneg %p141
        %p302 = pneg %p138
        %p303 = pneg %p162
        %p304 = pneg %p159
        %p305 = pneg %p190
        %p306 = pneg %p187
        %s307 = sand.u32 %s177, 1
        %s308 = scalar_lea.sflag [#allocation8], %s307
        %s309 = sand.u32 %s177, 1
        %s310 = smul.addr %s309, 16
        %s311 = scalar_lea.vmem [#allocation11], %s310
        %p312 = scmp.lt.s32.totalorder %s40, 1
        %s313 = scalar_select %p312, %s40, 1
        %p314 = scmp.lt.s32.totalorder %s39, 0
        %s315 = scalar_select %p314, %s39, 0
        %s316 = sadd.s32 %s315, %s313
        %s317 = smul.addr %s316, 8
        %s318 = scalar_lea.vmem %s2, %s317
        %s319 = sshra.s32 %s41, 7
        %s320 = sand.u32 %s41, 127
        %s321 = sadd.s32 %s319, %s40
        %s322 = smul.u32 %s321, 128
        %s323 = sshra.s32 %s41, 7
        %s324 = sand.u32 %s41, 127
        %s325 = sadd.s32 %s322, %s324
        %s326 = sld [smem:[#allocation4 + %s325]]
        %p327 = scmp.eq.s32.totalorder %s41, 0
        // Predicated region
        $region45: #{tpu_custom_call.1} parent=35 // pred_check
          %p328 = pneg %p327
        $region46: #{tpu_custom_call.1} parent=35 // pred_check_branch
          %330 = sbr.rel (%p328) target = $region48
        $region47: #{tpu_custom_call.1} parent=35 // pred_region
          %331 = vst [vmem:[#allocation2] sm:$0xff] 0.0
          %332 = vst [vmem:[#allocation2 + $0x8] sm:$0xff] 0.0
        $region48: #{tpu_custom_call.1} parent=35 // pred_fallthru
          _
        %s333 = sld [smem:[#allocation5 + %s40]]
        %p334 = scmp.lt.s32.totalorder %s41, %s333
        // Predicated region
        $region49: #{tpu_custom_call.1} parent=35 // pred_check
          %p335 = pneg %p334
        $region50: #{tpu_custom_call.1} parent=35 // pred_check_branch
          %337 = sbr.rel (%p335) target = $region52
        $region51: #{tpu_custom_call.1} parent=35 // pred_region
          %v338 = vld [vmem:[%s318] sm:$0xff]
          %s339 = sshra.s32 %s41, 7
          %s340 = sand.u32 %s41, 127
          %s341 = sadd.s32 %s339, %s40
          %s342 = smul.u32 %s341, 128
          %s343 = sshra.s32 %s41, 7
          %s344 = sand.u32 %s41, 127
          %s345 = sadd.s32 %s342, %s344
          %s346 = sld [smem:[#allocation4 + %s345]]
          %s347 = smul.u32 %s346, 8
          %v348 = vlaneseq
          %v349 = vshrl.u32 %v348, 7
          %v350 = vstv %s347
          %v351 = vadd.s32 %v349, %v350
          %v352 = vcvt.s32.f32 %v351
          %v353 = vadd.s32 %v349, 8
          %v354 = vcvt.s32.f32 %v349
          %v355 = vcvt.s32.f32 %v353
          %v356 = vlaneseq
          %v357 = vshrl.u32 %v356, 7
          %v358 = vsub.s32 2, %v357
          %v359 = vrot.slane %v338, %v358
          %vm360 = vcmp.eq.f32.partialorder %v352, %v359
          %v361 = vlaneseq
          %v362 = vshrl.u32 %v361, 7
          %v363 = vsub.s32 6, %v362
          %v364 = vrot.slane %v338, %v363
          %v365 = vsel %vm360, %v364, 0.0
          %v366 = vlaneseq
          %v367 = vshrl.u32 %v366, 7
          %v368 = vsub.s32 3, %v367
          %v369 = vrot.slane %v338, %v368
          %vm370 = vcmp.eq.f32.partialorder %v352, %v369
          %v371 = vlaneseq
          %v372 = vshrl.u32 %v371, 7
          %v373 = vsub.s32 7, %v372
          %v374 = vrot.slane %v338, %v373
          %v375 = vsel %vm370, %v374, 0.0
          %v376 = vadd.f32 %v365, %v375
          %v377 = vlaneseq
          %v378 = vshrl.u32 %v377, 7
          %v379 = vsub.s32 0, %v378
          %v380 = vrot.slane %v338, %v379
          %vm381 = vcmp.eq.f32.partialorder %v354, %v380
          %vm382 = vcmp.eq.f32.partialorder %v355, %v380
          %v383 = vlaneseq
          %v384 = vshrl.u32 %v383, 7
          %v385 = vsub.s32 4, %v384
          %v386 = vrot.slane %v338, %v385
          %v387 = vsel %vm381, %v386, 0.0
          %v388 = vsel %vm382, %v386, 0.0
          %v389 = vlaneseq
          %v390 = vshrl.u32 %v389, 7
          %v391 = vsub.s32 1, %v390
          %v392 = vrot.slane %v338, %v391
          %vm393 = vcmp.eq.f32.partialorder %v354, %v392
          %vm394 = vcmp.eq.f32.partialorder %v355, %v392
          %v395 = vlaneseq
          %v396 = vshrl.u32 %v395, 7
          %v397 = vsub.s32 5, %v396
          %v398 = vrot.slane %v338, %v397
          %v399 = vsel %vm393, %v398, 0.0
          %v400 = vsel %vm394, %v398, 0.0
          %v401 = vadd.f32 %v387, %v399
          %v402 = vadd.f32 %v388, %v400
          %v404 = vcombine.high %v376, %v376
          %v406 = vunpack.c.l.s4 1966171168
          %v407 = vunpack.c.0.s8 %v406
          %v408 = vlaneseq
          %v409 = vshrl.u32 %v408, 7
          %v410 = vsub.s32 %v407, %v409
          %v411 = vrot.slane %v376, %v410
          %v413 = vunpack.c.l.s4 1966171168
          %v414 = vunpack.c.0.s8 %v413
          %v415 = vlaneseq
          %v416 = vshrl.u32 %v415, 7
          %v417 = vsub.s32 %v414, %v416
          %v418 = vrot.slane %v404, %v417
          %v419 = vcombine.high %v411, %v411
          %v420 = vcombine.high %v418, %v418
          %v422 = vunpack.c.l.s4 1966171168
          %v423 = vunpack.c.0.s8 %v422
          %v424 = vlaneseq
          %v425 = vshrl.u32 %v424, 7
          %v426 = vsub.s32 %v423, %v425
          %v427 = vrot.slane %v411, %v426
          %v429 = vunpack.c.l.s4 1966171168
          %v430 = vunpack.c.0.s8 %v429
          %v431 = vlaneseq
          %v432 = vshrl.u32 %v431, 7
          %v433 = vsub.s32 %v430, %v432
          %v434 = vrot.slane %v418, %v433
          %v436 = vunpack.c.l.s4 1966171168
          %v437 = vunpack.c.0.s8 %v436
          %v438 = vlaneseq
          %v439 = vshrl.u32 %v438, 7
          %v440 = vsub.s32 %v437, %v439
          %v441 = vrot.slane %v419, %v440
          %v443 = vunpack.c.l.s4 1966171168
          %v444 = vunpack.c.0.s8 %v443
          %v445 = vlaneseq
          %v446 = vshrl.u32 %v445, 7
          %v447 = vsub.s32 %v444, %v446
          %v448 = vrot.slane %v420, %v447
          %v449 = vcombine.high %v427, %v427
          %v450 = vcombine.high %v434, %v434
          %v451 = vcombine.high %v441, %v441
          %v452 = vcombine.high %v448, %v448
          %v453 = vlaneseq
          %v454 = vshrl.u32 %v453, 7
          %v455 = vsub.s32 0, %v454
          %v456 = vrot.slane %v427, %v455
          %v457 = vlaneseq
          %v458 = vshrl.u32 %v457, 7
          %v459 = vsub.s32 0, %v458
          %v460 = vrot.slane %v441, %v459
          %v461 = vlaneseq
          %v462 = vshrl.u32 %v461, 7
          %v463 = vsub.s32 0, %v462
          %v464 = vrot.slane %v449, %v463
          %v465 = vlaneseq
          %v466 = vshrl.u32 %v465, 7
          %v467 = vsub.s32 0, %v466
          %v468 = vrot.slane %v451, %v467
          %v469 = vlaneseq
          %v470 = vshrl.u32 %v469, 7
          %v471 = vsub.s32 0, %v470
          %v472 = vrot.slane %v434, %v471
          %v473 = vlaneseq
          %v474 = vshrl.u32 %v473, 7
          %v475 = vsub.s32 0, %v474
          %v476 = vrot.slane %v448, %v475
          %v477 = vlaneseq
          %v478 = vshrl.u32 %v477, 7
          %v479 = vsub.s32 0, %v478
          %v480 = vrot.slane %v450, %v479
          %v481 = vlaneseq
          %v482 = vshrl.u32 %v481, 7
          %v483 = vsub.s32 0, %v482
          %v484 = vrot.slane %v452, %v483
          %v493 = vmul.f32 %v456, %v401
          %v494 = vmul.f32 %v456, %v402
          %v495 = vmul.f32 %v460, %v401
          %v496 = vmul.f32 %v460, %v402
          %v497 = vmul.f32 %v464, %v401
          %v498 = vmul.f32 %v464, %v402
          %v499 = vmul.f32 %v468, %v401
          %v500 = vmul.f32 %v468, %v402
          %v501 = vmul.f32 %v472, %v401
          %v502 = vmul.f32 %v472, %v402
          %v503 = vmul.f32 %v476, %v401
          %v504 = vmul.f32 %v476, %v402
          %v505 = vmul.f32 %v480, %v401
          %v506 = vmul.f32 %v480, %v402
          %v507 = vmul.f32 %v484, %v401
          %v508 = vmul.f32 %v484, %v402
          %v509 = vld [vmem:[%s276] sm:$0xff]
          %v510 = vld [vmem:[%s276 + $0x8] sm:$0xff]
          %v511 = vld [vmem:[%s276 + $0x10] sm:$0xff]
          %v512 = vld [vmem:[%s276 + $0x18] sm:$0xff]
          %v513 = vld [vmem:[#allocation9] sm:$0xff]
          %v514 = vld [vmem:[#allocation9 + $0x8] sm:$0xff]
          %vm515 = vcmask 261120
          %v517 = vsel %vm515, %v513, 0
          %v520 = vsel %vm515, %v514, 0
          %522 = vmatprep.subr.mxu0 0.0
          %523 = vmatpush1.msra.mxu0 0.0
          %524 = vmatprep.subr.mxu0 0.0
          %525 = vmatpush1.msra.mxu0 0.0
          %526 = vmatprep.subr.mxu0 0.0
          %527 = vmatpush1.msra.mxu0 0.0
          %528 = vmatprep.subr.mxu0 0.0
          %529 = vmatpush1.msra.mxu0 0.0
          %530 = vmatprep.subr.mxu0 0.0
          %531 = vmatpush1.msra.mxu0 0.0
          %532 = vmatprep.subr.mxu0 0.0
          %533 = vmatpush1.msra.mxu0 0.0
          %534 = vmatprep.subr.mxu0 0.0
          %535 = vmatpush1.msra.mxu0 0.0
          %536 = vmatprep.subr.mxu0 0.0
          %537 = vmatpush1.msra.mxu0 0.0
          %538 = vmatprep.subr.mxu0 0.0
          %539 = vmatpush1.msra.mxu0 0.0
          %540 = vmatprep.subr.mxu0 0.0
          %541 = vmatpush1.msra.mxu0 0.0
          %542 = vmatprep.subr.mxu0 0.0
          %543 = vmatpush1.msra.mxu0 0.0
          %544 = vmatprep.subr.mxu0 0.0
          %545 = vmatpush1.msra.mxu0 0.0
          %546 = vmatprep.subr.mxu0 0.0
          %547 = vmatpush1.msra.mxu0 %v512
          %548 = vmatprep.subr.mxu0 0.0
          %549 = vmatpush1.msra.mxu0 %v511
          %550 = vmatprep.subr.mxu0 0.0
          %551 = vmatpush1.msra.mxu0 %v510
          %552 = vmatprep.subr.mxu0 0.0
          %553 = vmatpush1.msra.mxu0 %v509
          %554 = vmatprep.subr.mxu0 0.0
          %555 = vmatpush2.msra.mxu0 0.0
          %556 = vmatprep.subr.mxu0 0.0
          %557 = vmatpush2.msra.mxu0 0.0
          %558 = vmatprep.subr.mxu0 0.0
          %559 = vmatpush2.msra.mxu0 0.0
          %560 = vmatprep.subr.mxu0 0.0
          %561 = vmatpush2.msra.mxu0 0.0
          %562 = vmatprep.subr.mxu0 0.0
          %563 = vmatpush2.msra.mxu0 0.0
          %564 = vmatprep.subr.mxu0 0.0
          %565 = vmatpush2.msra.mxu0 0.0
          %566 = vmatprep.subr.mxu0 0.0
          %567 = vmatpush2.msra.mxu0 0.0
          %568 = vmatprep.subr.mxu0 0.0
          %569 = vmatpush2.msra.mxu0 0.0
          %570 = vmatprep.subr.mxu0 0.0
          %571 = vmatpush2.msra.mxu0 0.0
          %572 = vmatprep.subr.mxu0 0.0
          %573 = vmatpush2.msra.mxu0 0.0
          %574 = vmatprep.subr.mxu0 0.0
          %575 = vmatpush2.msra.mxu0 0.0
          %576 = vmatprep.subr.mxu0 0.0
          %577 = vmatpush2.msra.mxu0 0.0
          %578 = vmatprep.subr.mxu0 0.0
          %579 = vmatpush2.msra.mxu0 0.0
          %580 = vmatprep.subr.mxu0 0.0
          %581 = vmatpush2.msra.mxu0 0.0
          %582 = vmatprep.subr.mxu0 0.0
          %583 = vmatpush2.msra.mxu0 0.0
          %584 = vmatprep.subr.mxu0 0.0
          %585 = vmatpush2.msra.mxu0 0.0
          %586 = vmatprep.mubr.f32.mxu0 0.0
          %587 = vmatmul.mubr.f32.gmra.mxu0 %v517
          %v588 = vpop.f32.mrf.mxu0
          %v589 = vadd.f32 0.0, %v588
          %v590 = vpop.f32.mrf.mxu0
          %591 = vmatprep.mubr.f32.mxu0 0.0
          %592 = vmatmul.mubr.f32.gmra.mxu0 %v520
          %v593 = vpop.f32.mrf.mxu0
          %v594 = vadd.f32 0.0, %v593
          %v595 = vpop.f32.mrf.mxu0
          %596 = vdwg.mxu0
          %v597 = vld [vmem:[#allocation2] sm:$0xff]
          %v598 = vld [vmem:[#allocation2 + $0x8] sm:$0xff]
          %599 = vmatprep.subr.mxu0 0.0
          %600 = vmatpush1.msra.mxu0 %v508
          %601 = vmatprep.subr.mxu0 0.0
          %602 = vmatpush1.msra.mxu0 %v507
          %603 = vmatprep.subr.mxu0 0.0
          %604 = vmatpush1.msra.mxu0 %v506
          %605 = vmatprep.subr.mxu0 0.0
          %606 = vmatpush1.msra.mxu0 %v505
          %607 = vmatprep.subr.mxu0 0.0
          %608 = vmatpush1.msra.mxu0 %v504
          %609 = vmatprep.subr.mxu0 0.0
          %610 = vmatpush1.msra.mxu0 %v503
          %611 = vmatprep.subr.mxu0 0.0
          %612 = vmatpush1.msra.mxu0 %v502
          %613 = vmatprep.subr.mxu0 0.0
          %614 = vmatpush1.msra.mxu0 %v501
          %615 = vmatprep.subr.mxu0 0.0
          %616 = vmatpush1.msra.mxu0 %v500
          %617 = vmatprep.subr.mxu0 0.0
          %618 = vmatpush1.msra.mxu0 %v499
          %619 = vmatprep.subr.mxu0 0.0
          %620 = vmatpush1.msra.mxu0 %v498
          %621 = vmatprep.subr.mxu0 0.0
          %622 = vmatpush1.msra.mxu0 %v497
          %623 = vmatprep.subr.mxu0 0.0
          %624 = vmatpush1.msra.mxu0 %v496
          %625 = vmatprep.subr.mxu0 0.0
          %626 = vmatpush1.msra.mxu0 %v495
          %627 = vmatprep.subr.mxu0 0.0
          %628 = vmatpush1.msra.mxu0 %v494
          %629 = vmatprep.subr.mxu0 0.0
          %630 = vmatpush1.msra.mxu0 %v493
          %631 = vmatprep.subr.mxu0 0.0
          %632 = vmatpush2.msra.mxu0 0.0
          %633 = vmatprep.subr.mxu0 0.0
          %634 = vmatpush2.msra.mxu0 0.0
          %635 = vmatprep.subr.mxu0 0.0
          %636 = vmatpush2.msra.mxu0 0.0
          %637 = vmatprep.subr.mxu0 0.0
          %638 = vmatpush2.msra.mxu0 0.0
          %639 = vmatprep.subr.mxu0 0.0
          %640 = vmatpush2.msra.mxu0 0.0
          %641 = vmatprep.subr.mxu0 0.0
          %642 = vmatpush2.msra.mxu0 0.0
          %643 = vmatprep.subr.mxu0 0.0
          %644 = vmatpush2.msra.mxu0 0.0
          %645 = vmatprep.subr.mxu0 0.0
          %646 = vmatpush2.msra.mxu0 0.0
          %647 = vmatprep.subr.mxu0 0.0
          %648 = vmatpush2.msra.mxu0 0.0
          %649 = vmatprep.subr.mxu0 0.0
          %650 = vmatpush2.msra.mxu0 0.0
          %651 = vmatprep.subr.mxu0 0.0
          %652 = vmatpush2.msra.mxu0 0.0
          %653 = vmatprep.subr.mxu0 0.0
          %654 = vmatpush2.msra.mxu0 0.0
          %655 = vmatprep.subr.mxu0 0.0
          %656 = vmatpush2.msra.mxu0 0.0
          %657 = vmatprep.subr.mxu0 0.0
          %658 = vmatpush2.msra.mxu0 0.0
          %659 = vmatprep.subr.mxu0 0.0
          %660 = vmatpush2.msra.mxu0 0.0
          %661 = vmatprep.subr.mxu0 0.0
          %662 = vmatpush2.msra.mxu0 0.0
          %663 = vmatprep.mubr.f32.mxu0 0.0
          %664 = vmatmul.mubr.f32.gmra.mxu0 %v589
          %v665 = vpop.f32.mrf.mxu0
          %v666 = vadd.f32 0.0, %v665
          %v667 = vpop.f32.mrf.mxu0
          %668 = vmatprep.mubr.f32.mxu0 0.0
          %669 = vmatmul.mubr.f32.gmra.mxu0 %v594
          %v670 = vpop.f32.mrf.mxu0
          %v671 = vadd.f32 0.0, %v670
          %v672 = vpop.f32.mrf.mxu0
          %673 = vdwg.mxu0
          %v674 = vadd.f32 %v597, %v666
          %v675 = vadd.f32 %v598, %v671
          %676 = vst [vmem:[#allocation2] sm:$0xff] %v674
          %677 = vst [vmem:[#allocation2 + $0x8] sm:$0xff] %v675
        $region52: #{tpu_custom_call.1} parent=35 // pred_fallthru
          _
        %p678 = scmp.eq.s32.totalorder %s41, 1
        // Predicated region
        $region53: #{tpu_custom_call.1} parent=35 // pred_check
          %p679 = pneg %p678
        $region54: #{tpu_custom_call.1} parent=35 // pred_check_branch
          %681 = sbr.rel (%p679) target = $region56
        $region55: #{tpu_custom_call.1} parent=35 // pred_region
          %v682 = vld [vmem:[#allocation2] sm:$0xff]
          %v683 = vld [vmem:[#allocation2 + $0x8] sm:$0xff]
          %v684 = vld [vmem:[%s5] sm:$0xff]
          %v685 = vld [vmem:[%s5 + $0x8] sm:$0xff]
          %687 = vset.pattern.permute.xlu0 0
          %688 = vperm.xlu0 %687, %v684
          %v689 = vpop.permute.xlu0 %688
          %692 = vset.pattern.permute.xlu0 0
          %693 = vperm.xlu0 %692, %v685
          %v694 = vpop.permute.xlu0 %693
          %v696 = vadd.f32 %v682, %v689
          %v697 = vadd.f32 %v683, %v694
          %v698 = vmax.f32 %v696, 0.0
          %v699 = vmax.f32 %v697, 0.0
          %700 = vst [vmem:[%s311] sm:$0xff] %v698
          %701 = vst [vmem:[%s311 + $0x8] sm:$0xff] %v699
        $region56: #{tpu_custom_call.1} parent=35 // pred_fallthru
          _
        %s702 = sand.u32 %s177, 1
        %s703 = scalar_lea.sflag [#allocation8], %s702
        %s704 = sand.u32 %s177, 1
        %s705 = smul.addr %s704, 16
        %s706 = scalar_lea.vmem [#allocation11], %s705
        // Predicated region
        $region57: #{tpu_custom_call.1} parent=35 // pred_check
          %p707 = pneg %p187
        $region58: #{tpu_custom_call.1} parent=35 // pred_check_branch
          %709 = sbr.rel (%p707) target = $region60
        $region59: #{tpu_custom_call.1} parent=35 // pred_region
          %s711 = ssub.s32 256, 256
          %712 = vsyncadd %s703, %s711
          %s713 = smul.addr %s40, 2
          %s714 = sadd.s32 %s39, %s713
          %s715 = smul.addr %s714, 128
          %s716 = scalar_lea.hbm %s6, %s715
          %s717 = sshll.u32 %s706, 4
          %s718 = int_to_ptr.vmem [resolvable:$true] %s717
          %723 = dma.vmem_to_hbm [thread:$0]  %s718, 256, %s716, %s703, 128, 128, 8
        $region60: #{tpu_custom_call.1} parent=35 // pred_fallthru
          _
      $region36: #{tpu_custom_call.1} parent=5 // pred_fallthru
        _
      %p724 = scmp.le.s32.totalorder 2, %s29
      // Predicated region
      $region61: #{tpu_custom_call.1} parent=5 // pred_check
        %p725 = pneg %p724
      $region62: #{tpu_custom_call.1} parent=5 // pred_check_branch
        %727 = sbr.rel (%p725) target = $region64
      $region63: #{tpu_custom_call.1} parent=5 // pred_region
        %s728 = ssub.s32 %s29, 2
        // Predicated region
        $region65: #{tpu_custom_call.1} parent=63 // pred_check
          %p729 = pneg %p193
        $region66: #{tpu_custom_call.1} parent=63 // pred_check_branch
          %731 = sbr.rel (%p729) target = $region68
        $region67: #{tpu_custom_call.1} parent=63 // pred_region
          %s732 = sand.u32 %s178, 1
          %s733 = scalar_lea.sflag [#allocation8], %s732
          %s734 = sand.u32 %s178, 1
          %s735 = smul.addr %s734, 16
          %s736 = scalar_lea.vmem [#allocation11], %s735
          %737 = dma.done %s733, 256
        $region68: #{tpu_custom_call.1} parent=63 // pred_fallthru
          _
      $region64: #{tpu_custom_call.1} parent=5 // pred_fallthru
        _
    $region6: #{tpu_custom_call.1} parent=1 // loop_footer
      %s33 = sadd.s32 1, %s29
    $region7: #{tpu_custom_call.1} parent=1 // loop_footer_branch
      %28 = sbr.rel target = $region3
    $region8: #{tpu_custom_call.1} parent=1 // loop_exit
      _
    %738 = vsyncpa [#allocation7], 1
    %s739 = scalar_lea.sflag [#allocation7], 1
    %740 = vsyncpa %s739, 1
    %741 = vsyncpa [#allocation10], 1
    %742 = vsyncpa [#allocation8], 1
    %s743 = scalar_lea.sflag [#allocation8], 1
    %744 = vsyncpa %s743, 1

</llo_original>
